<compile_context>
chip_gen: v6e
topology: v6e:2x2x1
jax: 0.10.0
libtpu: 0.0.40
codegen_flags: <defaults>
</compile_context>

<pallas_src>
import jax
import jax.numpy as jnp
import numpy as np
from jax.experimental import pallas as pl
from jax.experimental.pallas import tpu as pltpu

# ----- static config (small shapes consistent with the module defaults) -----
B, T, C = 2, 8, 4          # batch, time steps, input channels
SEQ_DIM = 32               # encoder output dim (encoder.get_output_dim())
SYM_DIM = 16               # symbolic vector dim
N_CLASSES = 18             # default n_classes
IN_DIM = SEQ_DIM + SYM_DIM        # concat fusion -> classifier input dim = 48
HIDDEN = max(64, IN_DIM // 2)     # _MLPHead hidden = 64
BN_EPS = 1e-5

FUSED_DIM = T * C + SYM_DIM       # kernel layer-1 K dim after the mean fold = 48
TB_SMALL = 8               # batch tile for tiny batches (sublane multiple)
TB_LARGE = 128             # batch tile once batch grows (fills MXU rows on all gens)
N_PAD = 128                # lane-dense padded logits width (>= N_CLASSES)


def fusion_net_kernel(x_ref, w1_ref, b1_ref, w2_ref, b2_ref, out_ref):
    """Per batch-tile: one fused matmul + bias + ReLU + output matmul.

    x_ref  : (TB, FUSED_DIM)   [flattened (T*C) sequence | sym] activation
    w1     : (FUSED_DIM, HIDDEN)  encoder Linear + mean pool + concat-split Linear#1
                                  + eval BatchNorm, all folded offline
    b1     : (1, HIDDEN)          folded bias
    w2, b2 : (HIDDEN, N_PAD), (1, N_PAD)   final Linear, zero-padded to 128 lanes
    out_ref: (TB, N_PAD)
    """
    h = jnp.dot(x_ref[...], w1_ref[...],
                preferred_element_type=jnp.float32) + b1_ref[...]       # (TB, HIDDEN)
    h = jnp.maximum(h, 0.0)          # ReLU; Dropout(p=0.3) is identity in eval mode
    out_ref[...] = jnp.dot(h, w2_ref[...],
                           preferred_element_type=jnp.float32) + b2_ref[...]


def make_params(key):
    """Raw parameters matching the PyTorch module's layers (weights as (in, out))."""
    ks = jax.random.split(key, 6)
    scale = 0.1
    wenc = scale * jax.random.normal(ks[0], (C, SEQ_DIM), jnp.float32)
    benc = scale * jax.random.normal(ks[1], (1, SEQ_DIM), jnp.float32)
    w1 = scale * jax.random.normal(ks[2], (IN_DIM, HIDDEN), jnp.float32)
    b1 = scale * jax.random.normal(ks[3], (1, HIDDEN), jnp.float32)
    w2 = scale * jax.random.normal(ks[4], (HIDDEN, N_CLASSES), jnp.float32)
    b2 = scale * jax.random.normal(ks[5], (1, N_CLASSES), jnp.float32)
    # BatchNorm1d default init: gamma=1, beta=0, running_mean=0, running_var=1
    gamma = jnp.ones((1, HIDDEN), jnp.float32)
    beta = jnp.zeros((1, HIDDEN), jnp.float32)
    rmean = jnp.zeros((1, HIDDEN), jnp.float32)
    rvar = jnp.ones((1, HIDDEN), jnp.float32)
    return dict(wenc=wenc, benc=benc, w1=w1, b1=b1,
                gamma=gamma, beta=beta, rmean=rmean, rvar=rvar,
                w2=w2, b2=b2)


def fold_params(p):
    """Offline algebraic folds (valid in eval mode only):
       - encoder Linear folded into the latent half of classifier Linear #1,
       - temporal mean folded into the weights (replicate w_lat/T across T row-groups
         so the kernel consumes the flattened (B, T*C) sequence directly),
       - BatchNorm1d (running stats) folded into classifier Linear #1,
       - the latent and symbolic halves concatenated into ONE layer-1 weight,
       - final Linear zero-padded to a lane-dense width of N_PAD=128.
    """
    bn_scale = p["gamma"] * jax.lax.rsqrt(p["rvar"] + BN_EPS)   # (1, HIDDEN)
    bn_shift = p["beta"] - p["rmean"] * bn_scale                # (1, HIDDEN)
    w1_lat = p["w1"][:SEQ_DIM]                                  # (SEQ_DIM, HIDDEN)
    w1_sym = p["w1"][SEQ_DIM:]                                  # (SYM_DIM, HIDDEN)
    w_lat = (p["wenc"] @ w1_lat) * bn_scale                     # (C, HIDDEN)
    w_seq = jnp.tile(w_lat / T, (T, 1))                         # (T*C, HIDDEN) mean fold
    w_sym = w1_sym * bn_scale                                   # (SYM_DIM, HIDDEN)
    w1 = jnp.concatenate([w_seq, w_sym], axis=0)                # (FUSED_DIM, HIDDEN)
    b1 = (p["benc"] @ w1_lat + p["b1"]) * bn_scale + bn_shift   # (1, HIDDEN)
    w2 = jnp.zeros((HIDDEN, N_PAD), jnp.float32).at[:, :N_CLASSES].set(p["w2"])
    b2 = jnp.zeros((1, N_PAD), jnp.float32).at[:, :N_CLASSES].set(p["b2"])
    return dict(w1=w1, b1=b1, w2=w2, b2=b2)


def fusion_net_forward(seq_btc, sym, fp):
    """seq_btc: (B, T, C) f32, sym: (B, SYM_DIM) f32 -> logits (B, N_CLASSES) f32."""
    b = seq_btc.shape[0]
    # Flatten time into features (row-major reshape; the mean is folded into w1)
    # and fuse with the symbolic vector into a single kernel activation.
    x = jnp.concatenate([seq_btc.reshape(b, T * C), sym], axis=1)   # (b, FUSED_DIM)

    # Batch-adaptive tile: tiny batches use one 8-row tile, big batches fill MXU rows.
    tb = TB_SMALL if b <= TB_SMALL else TB_LARGE
    b_pad = pl.cdiv(b, tb) * tb
    if b_pad != b:
        x = jnp.pad(x, ((0, b_pad - b), (0, 0)))

    grid = (b_pad // tb,)

    def weight_spec(arr):
        # Full-array block, same block every grid step -> stays VMEM-resident.
        return pl.BlockSpec(arr.shape, lambda i: (0, 0))

    out = pl.pallas_call(
        fusion_net_kernel,
        out_shape=jax.ShapeDtypeStruct((b_pad, N_PAD), jnp.float32),
        grid=grid,
        in_specs=[pl.BlockSpec((tb, FUSED_DIM), lambda i: (i, 0)),
                  weight_spec(fp["w1"]), weight_spec(fp["b1"]),
                  weight_spec(fp["w2"]), weight_spec(fp["b2"])],
        out_specs=pl.BlockSpec((tb, N_PAD), lambda i: (i, 0)),
        compiler_params=pltpu.CompilerParams(dimension_semantics=("parallel",)),
    )(x, fp["w1"], fp["b1"], fp["w2"], fp["b2"])

    # Single combined slice: drop batch padding and lane padding of the logits.
    return out[:b, :N_CLASSES]


def fusion_net_reference(seq_btc, sym, p):
    """Pure-JAX reference mirroring the PyTorch eval-mode forward (unfolded params)."""
    lat = jnp.einsum("btc,cd->btd", seq_btc, p["wenc"]) + p["benc"]   # encoder
    lat = lat.mean(axis=1)                                            # mean pool
    fused = jnp.concatenate([lat, sym], axis=1)                       # concat fusion
    h = fused @ p["w1"] + p["b1"]
    h = (h - p["rmean"]) / jnp.sqrt(p["rvar"] + BN_EPS)               # BatchNorm1d (eval)
    h = h * p["gamma"] + p["beta"]
    h = jnp.maximum(h, 0.0)                                           # ReLU (Dropout = id)
    return h @ p["w2"] + p["b2"]


# TODO(synk): gated fusion, cls pooling, sensor_latents path and training-mode
# BatchNorm/Dropout are alternate module configurations and are not implemented here.

if __name__ == "__main__":
    key = jax.random.PRNGKey(0)
    k_seq, k_sym, k_par = jax.random.split(key, 3)
    seq = jax.random.normal(k_seq, (B, T, C), jnp.float32)
    sym = jax.random.normal(k_sym, (B, SYM_DIM), jnp.float32)
    params = make_params(k_par)
    folded = fold_params(params)

    logits = fusion_net_forward(seq, sym, folded)
    logits = jax.block_until_ready(logits)

    ref = fusion_net_reference(seq, sym, params)
    # The encoder/BN/mean folds reassociate the affine math -> slightly loose tolerance.
    np.testing.assert_allclose(np.asarray(logits), np.asarray(ref),
                               rtol=2e-5, atol=2e-5)
    assert logits.shape == (B, N_CLASSES)
    print("KERNEL_OK")
</pallas_src>

<mosaic_0001>
module attributes {stable_mosaic.version = 11 : i64} {
  func.func @fusion_net_kernel(%arg0: i32, %arg1: memref<8x48xf32, #tpu.memory_space<vmem>>, %arg2: memref<48x64xf32, #tpu.memory_space<vmem>>, %arg3: memref<1x64xf32, #tpu.memory_space<vmem>>, %arg4: memref<64x128xf32, #tpu.memory_space<vmem>>, %arg5: memref<1x128xf32, #tpu.memory_space<vmem>>, %arg6: memref<8x128xf32, #tpu.memory_space<vmem>>) attributes {dimension_semantics = [#tpu.dimension_semantics<parallel>], iteration_bounds = array<i64: 1>, scalar_prefetch = 0 : i64, scratch_operands = 0 : i64, tpu.core_type = #tpu.core_type<tc>, window_params = [{transform_indices = @transform_0, window_bounds = array<i64: 8, 48>}, {pipeline_mode = #tpu.pipeline_mode<synchronous>, transform_indices = @transform_1, window_bounds = array<i64: 48, 64>}, {pipeline_mode = #tpu.pipeline_mode<synchronous>, transform_indices = @transform_2, window_bounds = array<i64: 1, 64>}, {pipeline_mode = #tpu.pipeline_mode<synchronous>, transform_indices = @transform_3, window_bounds = array<i64: 64, 128>}, {pipeline_mode = #tpu.pipeline_mode<synchronous>, transform_indices = @transform_4, window_bounds = array<i64: 1, 128>}, {transform_indices = @transform_5, window_bounds = array<i64: 8, 128>}]} {
    %c0 = arith.constant 0 : index
    %c0_0 = arith.constant 0 : index
    %0 = vector.load %arg1[%c0, %c0_0] : memref<8x48xf32, #tpu.memory_space<vmem>>, vector<8x48xf32>
    %c0_1 = arith.constant 0 : index
    %c0_2 = arith.constant 0 : index
    %1 = vector.load %arg2[%c0_1, %c0_2] : memref<48x64xf32, #tpu.memory_space<vmem>>, vector<48x64xf32>
    %cst = arith.constant dense<0.000000e+00> : vector<8x64xf32>
    %2 = tpu.matmul %0, %1, %cst {dimension_numbers = #tpu.dot_dimension_numbers<[1], [0], [0], [1], [0, 0, 1, 1], [], []>} : vector<8x48xf32>, vector<48x64xf32>, vector<8x64xf32> -> vector<8x64xf32>
    %c0_3 = arith.constant 0 : index
    %c0_4 = arith.constant 0 : index
    %3 = vector.load %arg3[%c0_3, %c0_4] : memref<1x64xf32, #tpu.memory_space<vmem>>, vector<1x64xf32>
    %4 = vector.broadcast %3 : vector<1x64xf32> to vector<8x64xf32>
    %5 = arith.addf %2, %4 : vector<8x64xf32>
    %cst_5 = arith.constant 0.000000e+00 : f32
    %6 = vector.broadcast %cst_5 : f32 to vector<8x64xf32>
    %7 = arith.maximumf %5, %6 : vector<8x64xf32>
    %c0_6 = arith.constant 0 : index
    %c0_7 = arith.constant 0 : index
    %8 = vector.load %arg4[%c0_6, %c0_7] : memref<64x128xf32, #tpu.memory_space<vmem>>, vector<64x128xf32>
    %cst_8 = arith.constant dense<0.000000e+00> : vector<8x128xf32>
    %9 = tpu.matmul %7, %8, %cst_8 {dimension_numbers = #tpu.dot_dimension_numbers<[1], [0], [0], [1], [0, 0, 1, 1], [], []>} : vector<8x64xf32>, vector<64x128xf32>, vector<8x128xf32> -> vector<8x128xf32>
    %c0_9 = arith.constant 0 : index
    %c0_10 = arith.constant 0 : index
    %10 = vector.load %arg5[%c0_9, %c0_10] : memref<1x128xf32, #tpu.memory_space<vmem>>, vector<1x128xf32>
    %11 = vector.broadcast %10 : vector<1x128xf32> to vector<8x128xf32>
    %12 = arith.addf %9, %11 : vector<8x128xf32>
    %c0_11 = arith.constant 0 : index
    %c0_12 = arith.constant 0 : index
    %13 = vector.load %arg6[%c0_11, %c0_12] : memref<8x128xf32, #tpu.memory_space<vmem>>, vector<8x128xf32>
    tpu.vector_store %arg6[%c0_11, %c0_12], %12 {strides = array<i32>} : memref<8x128xf32, #tpu.memory_space<vmem>>, vector<8x128xf32>,
    return
  }
  func.func @transform_0(%arg0: i32) -> (i32, i32) {
    %c0_i32 = arith.constant 0 : i32
    %c0_i32_0 = arith.constant 0 : i32
    return %arg0, %c0_i32 : i32, i32
  }
  func.func @transform_1(%arg0: i32) -> (i32, i32) {
    %c0_i32 = arith.constant 0 : i32
    %c0_i32_0 = arith.constant 0 : i32
    %c0_i32_1 = arith.constant 0 : i32
    return %c0_i32, %c0_i32_0 : i32, i32
  }
  func.func @transform_2(%arg0: i32) -> (i32, i32) {
    %c0_i32 = arith.constant 0 : i32
    %c0_i32_0 = arith.constant 0 : i32
    %c0_i32_1 = arith.constant 0 : i32
    return %c0_i32, %c0_i32_0 : i32, i32
  }
  func.func @transform_3(%arg0: i32) -> (i32, i32) {
    %c0_i32 = arith.constant 0 : i32
    %c0_i32_0 = arith.constant 0 : i32
    %c0_i32_1 = arith.constant 0 : i32
    return %c0_i32, %c0_i32_0 : i32, i32
  }
  func.func @transform_4(%arg0: i32) -> (i32, i32) {
    %c0_i32 = arith.constant 0 : i32
    %c0_i32_0 = arith.constant 0 : i32
    %c0_i32_1 = arith.constant 0 : i32
    return %c0_i32, %c0_i32_0 : i32, i32
  }
  func.func @transform_5(%arg0: i32) -> (i32, i32) {
    %c0_i32 = arith.constant 0 : i32
    %c0_i32_0 = arith.constant 0 : i32
    return %arg0, %c0_i32 : i32, i32
  }
}

</mosaic_0001>

<llo_original>
// kernel: tpu_custom_call.1
$region0: #{tpu_custom_call.1}
  #allocation0 [shape = 'u32[]', space=smem, size = 0x4, offset = 0x4, fixed_abs, tag = 'smem constant byte address 0x4 - core index']
  #allocation1 [shape = 'u32[144,128]{1,0:T(1,128)}', space=vmem, size = 0x12000, scoped, tag = 'internal scratch']
  %s0 = inlined_call_operand.hbm [shape: f32[8,48], index: 0, kind: input, shape index: {}]
  %s1 = inlined_call_operand.hbm [shape: f32[48,64], index: 1, kind: input, shape index: {}]
  %s2 = inlined_call_operand.vmem [shape: f32[1,64], index: 2, kind: input, shape index: {}]
  %s3 = inlined_call_operand.hbm [shape: f32[64,128], index: 3, kind: input, shape index: {}]
  %s4 = inlined_call_operand.vmem [shape: f32[1,128], index: 4, kind: input, shape index: {}]
  %s5 = inlined_call_operand.hbm [shape: f32[8,128], index: 5, kind: output, shape index: {}]
  %s6 = sld [smem:[#allocation0]]
  $region42: #{tpu_custom_call.1} parent=0
    _
  %s8 = ssub.s32 1, %s6
  %s9 = scalar_select 0, %s8, %s6
  $region1: #{tpu_custom_call.1} parent=0
    #allocation2 [shape = 'u8[4096]{0}', space=vmem, size = 0x1000, scoped, tag = 'input window, operand 0, single buffered']
    #allocation3 [shape = 's32[1]{0}', space=sflag, size = 0x4, scoped, tag = 'scoped memory for tpu_custom_call.1']
    #allocation4 [shape = 's32[1]{0}', space=sflag, size = 0x4, scoped, tag = 'scoped memory for tpu_custom_call.1']
    #allocation5 [shape = 'u8[24576]{0}', space=vmem, size = 0x6000, scoped, tag = 'input window, operand 1, single buffered']
    #allocation6 [shape = 's32[1]{0}', space=sflag, size = 0x4, scoped, tag = 'scoped memory for tpu_custom_call.1']
    #allocation7 [shape = 'u8[32768]{0}', space=vmem, size = 0x8000, scoped, tag = 'input window, operand 3, single buffered']
    #allocation8 [shape = 'u8[4096]{0}', space=vmem, size = 0x1000, scoped, tag = 'output window, operand 0, single buffered']
    %10 = vsyncpa [#allocation3], 0
    %11 = vsyncpa [#allocation6], 0
    %12 = vsyncpa [#allocation4], 0
    // Predicated region
    $region2: #{tpu_custom_call.1} parent=1 // pred_check
      _
    $region3: #{tpu_custom_call.1} parent=1 // pred_check_branch
      %14 = sbr.rel (0) target = $region5
    $region4: #{tpu_custom_call.1} parent=1 // pred_region
      %s16 = ssub.s32 128, 128
      %17 = vsyncadd [#allocation3], %s16
      %s19 = sshll.u32 [#allocation2], 4
      %s20 = int_to_ptr.vmem [resolvable:$true] %s19
      %22 = dma.hbm_to_vmem [thread:$0]  %s0, 128, %s20, [#allocation3]
    $region5: #{tpu_custom_call.1} parent=1 // pred_fallthru
      _
    // Predicated region
    $region6: #{tpu_custom_call.1} parent=1 // pred_check
      _
    $region7: #{tpu_custom_call.1} parent=1 // pred_check_branch
      %24 = sbr.rel (0) target = $region9
    $region8: #{tpu_custom_call.1} parent=1 // pred_region
      %s26 = ssub.s32 768, 768
      %27 = vsyncadd [#allocation6], %s26
      %s28 = sshll.u32 [#allocation5], 4
      %s29 = int_to_ptr.vmem [resolvable:$true] %s28
      %34 = dma.hbm_to_vmem [thread:$0]  %s1, 768, %s29, [#allocation6], 128, 128, 8
    $region9: #{tpu_custom_call.1} parent=1 // pred_fallthru
      _
    // Predicated region
    $region10: #{tpu_custom_call.1} parent=1 // pred_check
      _
    $region11: #{tpu_custom_call.1} parent=1 // pred_check_branch
      %36 = sbr.rel (0) target = $region13
    $region12: #{tpu_custom_call.1} parent=1 // pred_region
      _
    $region13: #{tpu_custom_call.1} parent=1 // pred_fallthru
      _
    // Predicated region
    $region14: #{tpu_custom_call.1} parent=1 // pred_check
      _
    $region15: #{tpu_custom_call.1} parent=1 // pred_check_branch
      %38 = sbr.rel (0) target = $region17
    $region16: #{tpu_custom_call.1} parent=1 // pred_region
      %s40 = ssub.s32 1024, 1024
      %41 = vsyncadd [#allocation6], %s40
      %s42 = sshll.u32 [#allocation7], 4
      %s43 = int_to_ptr.vmem [resolvable:$true] %s42
      %48 = dma.hbm_to_vmem [thread:$0]  %s3, 1024, %s43, [#allocation6], 128, 128, 8
    $region17: #{tpu_custom_call.1} parent=1 // pred_fallthru
      _
    // Predicated region
    $region18: #{tpu_custom_call.1} parent=1 // pred_check
      _
    $region19: #{tpu_custom_call.1} parent=1 // pred_check_branch
      %50 = sbr.rel (0) target = $region21
    $region20: #{tpu_custom_call.1} parent=1 // pred_region
      _
    $region21: #{tpu_custom_call.1} parent=1 // pred_fallthru
      _
    // Predicated region
    $region22: #{tpu_custom_call.1} parent=1 // pred_check
      _
    $region23: #{tpu_custom_call.1} parent=1 // pred_check_branch
      %52 = sbr.rel (0) target = $region25
    $region24: #{tpu_custom_call.1} parent=1 // pred_region
      %53 = dma.done [#allocation3], 128
    $region25: #{tpu_custom_call.1} parent=1 // pred_fallthru
      _
    // Predicated region
    $region26: #{tpu_custom_call.1} parent=1 // pred_check
      _
    $region27: #{tpu_custom_call.1} parent=1 // pred_check_branch
      %55 = sbr.rel (0) target = $region29
    $region28: #{tpu_custom_call.1} parent=1 // pred_region
      %56 = dma.done [#allocation6], 768
    $region29: #{tpu_custom_call.1} parent=1 // pred_fallthru
      _
    // Predicated region
    $region30: #{tpu_custom_call.1} parent=1 // pred_check
      _
    $region31: #{tpu_custom_call.1} parent=1 // pred_check_branch
      %58 = sbr.rel (0) target = $region33
    $region32: #{tpu_custom_call.1} parent=1 // pred_region
      %59 = dma.done [#allocation6], 1024
    $region33: #{tpu_custom_call.1} parent=1 // pred_fallthru
      _
    %v60 = vld [vmem:[#allocation2] sm:$0xff]
    %v61 = vld [vmem:[#allocation5] sm:$0xff]
    %v62 = vld [vmem:[#allocation5 + $0x8] sm:$0xff]
    %v63 = vld [vmem:[#allocation5 + $0x10] sm:$0xff]
    %v64 = vld [vmem:[#allocation5 + $0x18] sm:$0xff]
    %v65 = vld [vmem:[#allocation5 + $0x20] sm:$0xff]
    %v66 = vld [vmem:[#allocation5 + $0x28] sm:$0xff]
    %v67 = vld [vmem:[%s2] sm:$0x1]
    %v69 = vlaneseq
    %v70 = vshrl.u32 %v69, 7
    %v71 = vsub.s32 0, %v70
    %v72 = vrot.slane %v67, %v71
    %vm74 = vcmask 392192
    %v76 = vsel %vm74, %v60, 0
    %78 = vmatprep.subr.mxu0 0.0
    %79 = vmatpush1.msra.mxu0 0.0
    %80 = vmatprep.subr.mxu0 0.0
    %81 = vmatpush1.msra.mxu0 0.0
    %82 = vmatprep.subr.mxu0 0.0
    %83 = vmatpush1.msra.mxu0 0.0
    %84 = vmatprep.subr.mxu0 0.0
    %85 = vmatpush1.msra.mxu0 0.0
    %86 = vmatprep.subr.mxu0 0.0
    %87 = vmatpush1.msra.mxu0 0.0
    %88 = vmatprep.subr.mxu0 0.0
    %89 = vmatpush1.msra.mxu0 0.0
    %90 = vmatprep.subr.mxu0 0.0
    %91 = vmatpush1.msra.mxu0 0.0
    %92 = vmatprep.subr.mxu0 0.0
    %93 = vmatpush1.msra.mxu0 0.0
    %94 = vmatprep.subr.mxu0 0.0
    %95 = vmatpush1.msra.mxu0 0.0
    %96 = vmatprep.subr.mxu0 0.0
    %97 = vmatpush1.msra.mxu0 0.0
    %98 = vmatprep.subr.mxu0 0.0
    %99 = vmatpush1.msra.mxu0 %v66
    %100 = vmatprep.subr.mxu0 0.0
    %101 = vmatpush1.msra.mxu0 %v65
    %102 = vmatprep.subr.mxu0 0.0
    %103 = vmatpush1.msra.mxu0 %v64
    %104 = vmatprep.subr.mxu0 0.0
    %105 = vmatpush1.msra.mxu0 %v63
    %106 = vmatprep.subr.mxu0 0.0
    %107 = vmatpush1.msra.mxu0 %v62
    %108 = vmatprep.subr.mxu0 0.0
    %109 = vmatpush1.msra.mxu0 %v61
    %110 = vmatprep.subr.mxu0 0.0
    %111 = vmatpush2.msra.mxu0 0.0
    %112 = vmatprep.subr.mxu0 0.0
    %113 = vmatpush2.msra.mxu0 0.0
    %114 = vmatprep.subr.mxu0 0.0
    %115 = vmatpush2.msra.mxu0 0.0
    %116 = vmatprep.subr.mxu0 0.0
    %117 = vmatpush2.msra.mxu0 0.0
    %118 = vmatprep.subr.mxu0 0.0
    %119 = vmatpush2.msra.mxu0 0.0
    %120 = vmatprep.subr.mxu0 0.0
    %121 = vmatpush2.msra.mxu0 0.0
    %122 = vmatprep.subr.mxu0 0.0
    %123 = vmatpush2.msra.mxu0 0.0
    %124 = vmatprep.subr.mxu0 0.0
    %125 = vmatpush2.msra.mxu0 0.0
    %126 = vmatprep.subr.mxu0 0.0
    %127 = vmatpush2.msra.mxu0 0.0
    %128 = vmatprep.subr.mxu0 0.0
    %129 = vmatpush2.msra.mxu0 0.0
    %130 = vmatprep.subr.mxu0 0.0
    %131 = vmatpush2.msra.mxu0 0.0
    %132 = vmatprep.subr.mxu0 0.0
    %133 = vmatpush2.msra.mxu0 0.0
    %134 = vmatprep.subr.mxu0 0.0
    %135 = vmatpush2.msra.mxu0 0.0
    %136 = vmatprep.subr.mxu0 0.0
    %137 = vmatpush2.msra.mxu0 0.0
    %138 = vmatprep.subr.mxu0 0.0
    %139 = vmatpush2.msra.mxu0 0.0
    %140 = vmatprep.subr.mxu0 0.0
    %141 = vmatpush2.msra.mxu0 0.0
    %142 = vmatprep.mubr.f32.mxu0 0.0
    %143 = vmatmul.mubr.f32.gmra.mxu0 %v76
    %v144 = vpop.f32.mrf.mxu0
    %v145 = vadd.f32 %v72, %v144
    %v146 = vpop.f32.mrf.mxu0
    %147 = vdwg.mxu0
    %v148 = vmax.f32 %v145, 0.0
    %v149 = vld [vmem:[#allocation7] sm:$0xff]
    %v150 = vld [vmem:[#allocation7 + $0x8] sm:$0xff]
    %v151 = vld [vmem:[#allocation7 + $0x10] sm:$0xff]
    %v152 = vld [vmem:[#allocation7 + $0x18] sm:$0xff]
    %v153 = vld [vmem:[#allocation7 + $0x20] sm:$0xff]
    %v154 = vld [vmem:[#allocation7 + $0x28] sm:$0xff]
    %v155 = vld [vmem:[#allocation7 + $0x30] sm:$0xff]
    %v156 = vld [vmem:[#allocation7 + $0x38] sm:$0xff]
    %v157 = vld [vmem:[%s4] sm:$0x1]
    %v159 = vlaneseq
    %v160 = vshrl.u32 %v159, 7
    %v161 = vsub.s32 0, %v160
    %v162 = vrot.slane %v157, %v161
    %vm164 = vcmask 523264
    %v166 = vsel %vm164, %v148, 0
    %168 = vmatprep.subr.mxu0 0.0
    %169 = vmatpush1.msra.mxu0 0.0
    %170 = vmatprep.subr.mxu0 0.0
    %171 = vmatpush1.msra.mxu0 0.0
    %172 = vmatprep.subr.mxu0 0.0
    %173 = vmatpush1.msra.mxu0 0.0
    %174 = vmatprep.subr.mxu0 0.0
    %175 = vmatpush1.msra.mxu0 0.0
    %176 = vmatprep.subr.mxu0 0.0
    %177 = vmatpush1.msra.mxu0 0.0
    %178 = vmatprep.subr.mxu0 0.0
    %179 = vmatpush1.msra.mxu0 0.0
    %180 = vmatprep.subr.mxu0 0.0
    %181 = vmatpush1.msra.mxu0 0.0
    %182 = vmatprep.subr.mxu0 0.0
    %183 = vmatpush1.msra.mxu0 0.0
    %184 = vmatprep.subr.mxu0 0.0
    %185 = vmatpush1.msra.mxu0 %v156
    %186 = vmatprep.subr.mxu0 0.0
    %187 = vmatpush1.msra.mxu0 %v155
    %188 = vmatprep.subr.mxu0 0.0
    %189 = vmatpush1.msra.mxu0 %v154
    %190 = vmatprep.subr.mxu0 0.0
    %191 = vmatpush1.msra.mxu0 %v153
    %192 = vmatprep.subr.mxu0 0.0
    %193 = vmatpush1.msra.mxu0 %v152
    %194 = vmatprep.subr.mxu0 0.0
    %195 = vmatpush1.msra.mxu0 %v151
    %196 = vmatprep.subr.mxu0 0.0
    %197 = vmatpush1.msra.mxu0 %v150
    %198 = vmatprep.subr.mxu0 0.0
    %199 = vmatpush1.msra.mxu0 %v149
    %200 = vmatprep.subr.mxu0 0.0
    %201 = vmatpush2.msra.mxu0 0.0
    %202 = vmatprep.subr.mxu0 0.0
    %203 = vmatpush2.msra.mxu0 0.0
    %204 = vmatprep.subr.mxu0 0.0
    %205 = vmatpush2.msra.mxu0 0.0
    %206 = vmatprep.subr.mxu0 0.0
    %207 = vmatpush2.msra.mxu0 0.0
    %208 = vmatprep.subr.mxu0 0.0
    %209 = vmatpush2.msra.mxu0 0.0
    %210 = vmatprep.subr.mxu0 0.0
    %211 = vmatpush2.msra.mxu0 0.0
    %212 = vmatprep.subr.mxu0 0.0
    %213 = vmatpush2.msra.mxu0 0.0
    %214 = vmatprep.subr.mxu0 0.0
    %215 = vmatpush2.msra.mxu0 0.0
    %216 = vmatprep.subr.mxu0 0.0
    %217 = vmatpush2.msra.mxu0 0.0
    %218 = vmatprep.subr.mxu0 0.0
    %219 = vmatpush2.msra.mxu0 0.0
    %220 = vmatprep.subr.mxu0 0.0
    %221 = vmatpush2.msra.mxu0 0.0
    %222 = vmatprep.subr.mxu0 0.0
    %223 = vmatpush2.msra.mxu0 0.0
    %224 = vmatprep.subr.mxu0 0.0
    %225 = vmatpush2.msra.mxu0 0.0
    %226 = vmatprep.subr.mxu0 0.0
    %227 = vmatpush2.msra.mxu0 0.0
    %228 = vmatprep.subr.mxu0 0.0
    %229 = vmatpush2.msra.mxu0 0.0
    %230 = vmatprep.subr.mxu0 0.0
    %231 = vmatpush2.msra.mxu0 0.0
    %232 = vmatprep.mubr.f32.mxu0 0.0
    %233 = vmatmul.mubr.f32.gmra.mxu0 %v166
    %v234 = vpop.f32.mrf.mxu0
    %v235 = vadd.f32 %v162, %v234
    %v236 = vpop.f32.mrf.mxu0
    %237 = vdwg.mxu0
    %238 = vst [vmem:[#allocation8] sm:$0xff] %v235
    // Predicated region
    $region34: #{tpu_custom_call.1} parent=1 // pred_check
      _
    $region35: #{tpu_custom_call.1} parent=1 // pred_check_branch
      %240 = sbr.rel (0) target = $region37
    $region36: #{tpu_custom_call.1} parent=1 // pred_region
      %s242 = ssub.s32 128, 128
      %243 = vsyncadd [#allocation4], %s242
      %s245 = sshll.u32 [#allocation8], 4
      %s246 = int_to_ptr.vmem [resolvable:$true] %s245
      %248 = dma.vmem_to_hbm [thread:$0]  %s246, 128, %s5, [#allocation4]
    $region37: #{tpu_custom_call.1} parent=1 // pred_fallthru
      _
    // Predicated region
    $region38: #{tpu_custom_call.1} parent=1 // pred_check
      _
    $region39: #{tpu_custom_call.1} parent=1 // pred_check_branch
      %250 = sbr.rel (0) target = $region41
    $region40: #{tpu_custom_call.1} parent=1 // pred_region
      %251 = dma.done [#allocation4], 128
    $region41: #{tpu_custom_call.1} parent=1 // pred_fallthru
      _
    %252 = vsyncpa [#allocation3], 1
    %253 = vsyncpa [#allocation6], 1
    %254 = vsyncpa [#allocation4], 1

</llo_original>
